<compile_context>
chip_gen: v7x
topology: tpu7x:2x2x1
jax: 0.10.0
libtpu: 0.0.40
codegen_flags: <defaults>
</compile_context>

<pallas_src>
import functools

import jax
import jax.numpy as jnp
from jax import lax
from jax.experimental import pallas as pl
from jax.experimental.pallas import tpu as pltpu

_MB = 1024 * 1024


def _round_up(x: int, m: int) -> int:
    return ((x + m - 1) // m) * m


def _vmem_capacity_bytes() -> int:
    try:
        return int(pltpu.get_tpu_info().vmem_capacity_bytes)
    except Exception:
        return 64 * _MB  # conservative: v7x physical VMEM per TensorCore


def _label_smoothing_kernel(
    pred_ref, target_ref, out_ref, *, smoothing, num_classes, n_valid, block_m, mask_rows
):
    i = pl.program_id(0)

    x = pred_ref[...].astype(jnp.float32)  # (TM, C) logits, f32 math (v5e-safe)
    t = target_ref[...]                    # (TM, 1) int32 targets
    tm, c = x.shape

    # Numerically stable log-sum-exp along the class (lane) axis.
    m = jnp.max(x, axis=-1, keepdims=True)                               # (TM, 1)
    lse = jnp.log(jnp.sum(jnp.exp(x - m), axis=-1, keepdims=True)) + m   # (TM, 1)

    # sum_c logp = sum_c x - C * lse   (no (TM, C) logp / true_dist tensors)
    sum_x = jnp.sum(x, axis=-1, keepdims=True)                           # (TM, 1)
    sum_logp = sum_x - jnp.float32(c) * lse                              # (TM, 1)

    # logp at the target index: single masked select-and-sum.
    col_ids = lax.broadcasted_iota(jnp.int32, (tm, c), 1)
    x_at_t = jnp.sum(jnp.where(col_ids == t, x, 0.0), axis=-1, keepdims=True)
    logp_at_t = x_at_t - lse                                             # (TM, 1)

    confidence = jnp.float32(1.0 - smoothing)
    off = jnp.float32(smoothing / (num_classes - 1))
    # sum_c(-true_dist * logp) = -(conf - off)*logp[t] - off*sum_c(logp)
    per_row = -(confidence - off) * logp_at_t - off * sum_logp           # (TM, 1)

    # Mask rows of the ragged last tile (their VMEM content is stale/undefined
    # because the input DMA is clamped to the array bounds).
    if mask_rows:
        row_ids = i * block_m + lax.broadcasted_iota(jnp.int32, (tm, 1), 0)
        per_row = jnp.where(row_ids < n_valid, per_row, 0.0)

    # Per-tile partial sum -> this tile's own (1,1,1) output block.
    out_ref[...] = jnp.sum(per_row).reshape(1, 1, 1)


def label_smoothing_loss(pred, target, *, num_classes, smoothing=0.1, block_m=None):
    """Pallas TPU implementation of LabelSmoothingLoss.forward.

    pred:   (N, C) float array of logits (any float dtype; math is f32).
    target: (N,)   int array of class indices.
    Returns a scalar float32 loss.
    """
    assert 0 <= smoothing < 1
    assert num_classes > 1, "smoothing/(num_classes-1) divides by zero for C==1"
    n, c = pred.shape
    assert c == num_classes

    dtype_bytes = jnp.dtype(pred.dtype).itemsize
    # Sublane quantum: 8 rows for 4-byte dtypes, 16 for 2-byte (bf16/f16).
    sublane_q = max(8, 32 // max(dtype_bytes, 1))

    # --- VMEM budgeting (generation-aware) --------------------------------
    cap = min(_vmem_capacity_bytes(), 128 * _MB)
    usable = min(int(cap * 0.6), 80 * _MB)  # ~38 MiB on v7x, ~76-80 MiB on v5e/v6e

    # Bytes of live VMEM per logits row:
    #   2x double-buffered native-dtype pred block
    # + 1x f32 cast temp (x lives across several reductions)
    # + 2x (block_m,1) int32 target block, lane-padded to 128 (512 B/row each)
    per_row_bytes = 2 * c * dtype_bytes + c * 4 + 2 * 128 * 4

    if block_m is None:
        bm_fit = max(sublane_q, usable // per_row_bytes)
        # Aim for ~24 MiB of pred per tile; bigger tiles give diminishing
        # returns and only hurt pipelining granularity.
        bm_target = max(sublane_q, (24 * _MB) // max(c * dtype_bytes, 1))
        block_m = int(min(bm_fit, bm_target))
    block_m = max(sublane_q, (block_m // sublane_q) * sublane_q)
    block_m = min(block_m, _round_up(n, sublane_q))

    num_tiles = pl.cdiv(n, block_m)
    mask_rows = (num_tiles * block_m) > n  # ragged last tile (no wrapper pad)

    target_2d = target.astype(jnp.int32).reshape(n, 1)

    kernel = functools.partial(
        _label_smoothing_kernel,
        smoothing=float(smoothing),
        num_classes=num_classes,
        n_valid=n,
        block_m=block_m,
        mask_rows=mask_rows,
    )

    est = block_m * per_row_bytes + 2 * _MB
    vmem_limit = int(max(32 * _MB, min(cap - 8 * _MB, est + 16 * _MB)))

    partials = pl.pallas_call(
        kernel,
        out_shape=jax.ShapeDtypeStruct((num_tiles, 1, 1), jnp.float32),
        grid=(num_tiles,),
        in_specs=[
            pl.BlockSpec((block_m, c), lambda i: (i, 0)),
            pl.BlockSpec((block_m, 1), lambda i: (i, 0)),
        ],
        # Each tile owns its own output block -> row axis can be parallel
        # (both TensorCores on v7x; neutral on v5e/v6e).
        out_specs=pl.BlockSpec((1, 1, 1), lambda i: (i, 0, 0)),
        compiler_params=pltpu.CompilerParams(
            dimension_semantics=("parallel",),
            vmem_limit_bytes=vmem_limit,
        ),
    )(pred, target_2d)

    return jnp.sum(partials) / jnp.float32(n)


def _reference(pred, target, *, num_classes, smoothing=0.1):
    """Pure-JAX reference mirroring the PyTorch module."""
    logp = jax.nn.log_softmax(pred.astype(jnp.float32), axis=-1)
    n, c = pred.shape
    true_dist = jnp.full((n, c), smoothing / (num_classes - 1), jnp.float32)
    true_dist = true_dist.at[jnp.arange(n), target].set(1.0 - smoothing)
    return jnp.mean(jnp.sum(-true_dist * logp, axis=-1))


if __name__ == "__main__":
    key = jax.random.PRNGKey(0)

    # Case 1: small f32, single tile, N a multiple of the sublane quantum.
    num_classes, batch, smoothing = 32, 8, 0.1
    k1, k2, key = jax.random.split(key, 3)
    pred = jax.random.normal(k1, (batch, num_classes), dtype=jnp.float32)
    target = jax.random.randint(k2, (batch,), 0, num_classes, dtype=jnp.int32)
    loss = label_smoothing_loss(pred, target, num_classes=num_classes, smoothing=smoothing)
    jax.block_until_ready(loss)
    ref = _reference(pred, target, num_classes=num_classes, smoothing=smoothing)
    assert jnp.allclose(loss, ref, atol=2e-5, rtol=1e-5), (loss, ref)

    # Case 2: bf16 logits, ragged batch (exercises the no-pad ragged tile mask).
    num_classes, batch = 32, 13
    k1, k2, key = jax.random.split(key, 3)
    pred_bf = jax.random.normal(k1, (batch, num_classes), dtype=jnp.float32).astype(jnp.bfloat16)
    target = jax.random.randint(k2, (batch,), 0, num_classes, dtype=jnp.int32)
    loss = label_smoothing_loss(pred_bf, target, num_classes=num_classes, smoothing=smoothing)
    jax.block_until_ready(loss)
    ref = _reference(pred_bf, target, num_classes=num_classes, smoothing=smoothing)
    assert jnp.allclose(loss, ref, atol=2e-5, rtol=1e-5), (loss, ref)

    # Case 3: multi-tile parallel partial sums (forced small tile) + ragged tail.
    num_classes, batch = 32, 40
    k1, k2, key = jax.random.split(key, 3)
    pred = jax.random.normal(k1, (batch, num_classes), dtype=jnp.float32)
    target = jax.random.randint(k2, (batch,), 0, num_classes, dtype=jnp.int32)
    loss = label_smoothing_loss(
        pred, target, num_classes=num_classes, smoothing=smoothing, block_m=16
    )
    jax.block_until_ready(loss)
    ref = _reference(pred, target, num_classes=num_classes, smoothing=smoothing)
    assert jnp.allclose(loss, ref, atol=2e-5, rtol=1e-5), (loss, ref)

    print("KERNEL_OK")
</pallas_src>

<mosaic_0001>
module attributes {stable_mosaic.version = 11 : i64} {
  func.func @_label_smoothing_kernel(%arg0: i32, %arg1: memref<8x32xf32, #tpu.memory_space<vmem>>, %arg2: memref<8x1xi32, #tpu.memory_space<vmem>>, %arg3: memref<1x1x1xf32, #tpu.memory_space<vmem>>) attributes {dimension_semantics = [#tpu.dimension_semantics<parallel>], iteration_bounds = array<i64: 1>, scalar_prefetch = 0 : i64, scratch_operands = 0 : i64, tpu.core_type = #tpu.core_type<tc>, window_params = [{transform_indices = @transform_0, window_bounds = array<i64: 8, 32>}, {transform_indices = @transform_1, window_bounds = array<i64: 8, 1>}, {transform_indices = @transform_2, window_bounds = array<i64: 1, 1, 1>}]} {
    %c0 = arith.constant 0 : index
    %c0_0 = arith.constant 0 : index
    %0 = vector.load %arg1[%c0, %c0_0] : memref<8x32xf32, #tpu.memory_space<vmem>>, vector<8x32xf32>
    %c0_1 = arith.constant 0 : index
    %c0_2 = arith.constant 0 : index
    %1 = vector.load %arg2[%c0_1, %c0_2] : memref<8x1xi32, #tpu.memory_space<vmem>>, vector<8x1xi32>
    %cst = arith.constant dense<0xFF800000> : vector<8xf32>
    %2 = vector.multi_reduction <maximumf>, %0, %cst [1] : vector<8x32xf32> to vector<8xf32>
    %3 = vector.shape_cast %2 : vector<8xf32> to vector<8x1xf32>
    %4 = vector.broadcast %3 : vector<8x1xf32> to vector<8x32xf32>
    %5 = arith.subf %0, %4 : vector<8x32xf32>
    %6 = math.exp %5 : vector<8x32xf32>
    %cst_3 = arith.constant dense<0.000000e+00> : vector<8xf32>
    %7 = vector.multi_reduction <add>, %6, %cst_3 [1] : vector<8x32xf32> to vector<8xf32>
    %8 = vector.shape_cast %7 : vector<8xf32> to vector<8x1xf32>
    %9 = math.log %8 : vector<8x1xf32>
    %10 = arith.addf %9, %3 : vector<8x1xf32>
    %cst_4 = arith.constant dense<0.000000e+00> : vector<8xf32>
    %11 = vector.multi_reduction <add>, %0, %cst_4 [1] : vector<8x32xf32> to vector<8xf32>
    %12 = vector.shape_cast %11 : vector<8xf32> to vector<8x1xf32>
    %cst_5 = arith.constant 3.200000e+01 : f32
    %13 = vector.broadcast %cst_5 : f32 to vector<8x1xf32>
    %14 = arith.mulf %13, %10 : vector<8x1xf32>
    %15 = arith.subf %12, %14 : vector<8x1xf32>
    %16 = tpu.iota {dimensions = array<i32: 1>} : vector<8x32xi32>
    %17 = vector.broadcast %1 : vector<8x1xi32> to vector<8x32xi32>
    %18 = arith.cmpi eq, %16, %17 : vector<8x32xi32>
    %cst_6 = arith.constant 0.000000e+00 : f32
    %19 = vector.broadcast %cst_6 : f32 to vector<8x32xf32>
    %20 = arith.select %18, %0, %19 : vector<8x32xi1>, vector<8x32xf32>
    %cst_7 = arith.constant dense<0.000000e+00> : vector<8xf32>
    %21 = vector.multi_reduction <add>, %20, %cst_7 [1] : vector<8x32xf32> to vector<8xf32>
    %22 = vector.shape_cast %21 : vector<8xf32> to vector<8x1xf32>
    %23 = arith.subf %22, %10 : vector<8x1xf32>
    %cst_8 = arith.constant 0.899999976 : f32
    %cst_9 = arith.constant 0.0032258064 : f32
    %24 = arith.subf %cst_8, %cst_9 : f32
    %cst_10 = arith.constant 0.000000e+00 : f32
    %25 = arith.subf %cst_10, %24 : f32
    %26 = vector.broadcast %25 : f32 to vector<8x1xf32>
    %27 = arith.mulf %26, %23 : vector<8x1xf32>
    %cst_11 = arith.constant 0.0032258064 : f32
    %28 = vector.broadcast %cst_11 : f32 to vector<8x1xf32>
    %29 = arith.mulf %28, %15 : vector<8x1xf32>
    %30 = arith.subf %27, %29 : vector<8x1xf32>
    %31 = vector.shape_cast %30 : vector<8x1xf32> to vector<1x8x1xf32>
    %cst_12 = arith.constant dense<0.000000e+00> : vector<1xf32>
    %32 = vector.multi_reduction <add>, %31, %cst_12 [1, 2] : vector<1x8x1xf32> to vector<1xf32>
    %33 = vector.shape_cast %32 : vector<1xf32> to vector<1x1x1xf32>
    %34 = vector.extract %33[0, 0, 0] : f32 from vector<1x1x1xf32>
    %35 = vector.broadcast %34 : f32 to vector<1x1x1xf32>
    %c0_13 = arith.constant 0 : index
    %c0_14 = arith.constant 0 : index
    %c0_15 = arith.constant 0 : index
    %36 = vector.load %arg3[%c0_13, %c0_14, %c0_15] : memref<1x1x1xf32, #tpu.memory_space<vmem>>, vector<1x1x1xf32>
    tpu.vector_store %arg3[%c0_13, %c0_14, %c0_15], %35 {strides = array<i32>} : memref<1x1x1xf32, #tpu.memory_space<vmem>>, vector<1x1x1xf32>,
    return
  }
  func.func @transform_0(%arg0: i32) -> (i32, i32) {
    %c0_i32 = arith.constant 0 : i32
    %c0_i32_0 = arith.constant 0 : i32
    return %arg0, %c0_i32 : i32, i32
  }
  func.func @transform_1(%arg0: i32) -> (i32, i32) {
    %c0_i32 = arith.constant 0 : i32
    %c0_i32_0 = arith.constant 0 : i32
    return %arg0, %c0_i32 : i32, i32
  }
  func.func @transform_2(%arg0: i32) -> (i32, i32, i32) {
    %c0_i32 = arith.constant 0 : i32
    %c0_i32_0 = arith.constant 0 : i32
    %c0_i32_1 = arith.constant 0 : i32
    return %arg0, %c0_i32, %c0_i32_0 : i32, i32, i32
  }
}

</mosaic_0001>

<llo_original>
// kernel: tpu_custom_call.1
$region0: #{tpu_custom_call.1}
  #allocation0 [shape = 'u32[]', space=smem, size = 0x4, offset = 0x4, fixed_abs, tag = 'smem constant byte address 0x4 - core index']
  #allocation1 [shape = 'u32[144,128]{1,0:T(1,128)}', space=vmem, size = 0x12000, scoped, tag = 'internal scratch']
  %s0 = inlined_call_operand.vmem [shape: f32[8,32], index: 0, kind: input, shape index: {}]
  %s1 = inlined_call_operand.vmem [shape: s32[8,1], index: 1, kind: input, shape index: {}]
  %s2 = inlined_call_operand.hbm [shape: f32[1,1,1], index: 2, kind: output, shape index: {}]
  %s3 = sld [smem:[#allocation0]]
  $region18: #{tpu_custom_call.1} parent=0
    _
  %s5 = ssub.s32 1, %s3
  %s6 = scalar_select 0, %s5, %s3
  $region1: #{tpu_custom_call.1} parent=0
    #allocation2 [shape = 'u8[512]{0}', space=vmem, size = 0x400, scoped, tag = 'output window, operand 0, single buffered']
    #allocation3 [shape = 's32[1]{0}', space=sflag, size = 0x4, scoped, tag = 'scoped memory for tpu_custom_call.1']
    %7 = vsyncpa [#allocation3], 0
    // Predicated region
    $region2: #{tpu_custom_call.1} parent=1 // pred_check
      _
    $region3: #{tpu_custom_call.1} parent=1 // pred_check_branch
      %9 = sbr.rel (0) target = $region5
    $region4: #{tpu_custom_call.1} parent=1 // pred_region
      _
    $region5: #{tpu_custom_call.1} parent=1 // pred_fallthru
      _
    // Predicated region
    $region6: #{tpu_custom_call.1} parent=1 // pred_check
      _
    $region7: #{tpu_custom_call.1} parent=1 // pred_check_branch
      %11 = sbr.rel (0) target = $region9
    $region8: #{tpu_custom_call.1} parent=1 // pred_region
      _
    $region9: #{tpu_custom_call.1} parent=1 // pred_fallthru
      _
    %v12 = vld [vmem:[%s0] sm:$0xff]
    %v13 = vld [vmem:[%s1] sm:$0xff]
    %vm14 = vcmask 261120
    %v15 = vsel %vm14, %v12, -inf
    %16 = vmax.xlane.f32.xlu0 %v15
    %v17 = vpop.xlane.xlu0 %16
    %v18 = vsub.f32 %v12, %v17
    %v19 = vmul.f32 %v18, 1.442695
    %v20 = vpow.pop %v19
    %v21 = vsel %vm14, %v20, 0.0
    %22 = vadd.xlane.f32.xlu0 %v21
    %v23 = vpop.xlane.xlu0 %22
    %v24 = vlog2.pop %v23
    %v25 = vmul.f32 %v24, 0.6931472
    %v26 = vadd.f32 %v25, %v17
    %v27 = vsel %vm14, %v12, 0.0
    %28 = vadd.xlane.f32.xlu0 %v27
    %v29 = vpop.xlane.xlu0 %28
    %v30 = vmul.f32 %v26, 32.0
    %v31 = vsub.f32 %v29, %v30
    %v32 = vlaneseq
    %v33 = vand.u32 %v32, 127
    %34 = vset.pattern.permute.xlu0 0
    %35 = vperm.xlu0 %34, %v13
    %v36 = vpop.permute.xlu0 %35
    %vm37 = vcmp.eq.s32.totalorder %v33, %v36
    %v38 = vsel %vm37, %v12, 0.0
    %v39 = vsel %vm14, %v38, 0.0
    %40 = vadd.xlane.f32.xlu0 %v39
    %v41 = vpop.xlane.xlu0 %40
    %v42 = vsub.f32 %v41, %v26
    %v43 = vmul.f32 %v42, -0.8967742
    %v44 = vmul.f32 %v31, 0.0032258064
    %v45 = vsub.f32 %v43, %v44
    %vm46 = vcmask 7168
    %v47 = vsel %vm46, %v45, 0.0
    %48 = vadd.xlane.f32.xlu0 %v47
    %v49 = vpop.xlane.xlu0 %48
    %v50 = vrot.slane %v49, 4
    %v51 = vadd.f32 %v49, %v50
    %v52 = vrot.slane %v51, 2
    %v53 = vadd.f32 %v51, %v52
    %v54 = vrot.slane %v53, 1
    %v55 = vadd.f32 %v53, %v54
    %s56 = vtos %v55
    %v57 = vstv %s56
    %vm58 = vcmask 0
    %59 = vst.msk [vmem:[#allocation2] sm:$0x1] %vm58, %v57
    // Predicated region
    $region10: #{tpu_custom_call.1} parent=1 // pred_check
      _
    $region11: #{tpu_custom_call.1} parent=1 // pred_check_branch
      %61 = sbr.rel (0) target = $region13
    $region12: #{tpu_custom_call.1} parent=1 // pred_region
      %s63 = ssub.s32 16, 16
      %64 = vsyncadd [#allocation3], %s63
      %s66 = sshll.u32 [#allocation2], 4
      %s67 = int_to_ptr.vmem [resolvable:$true] %s66
      %69 = dma.vmem_to_hbm [thread:$0]  %s67, 16, %s2, [#allocation3]
    $region13: #{tpu_custom_call.1} parent=1 // pred_fallthru
      _
    // Predicated region
    $region14: #{tpu_custom_call.1} parent=1 // pred_check
      _
    $region15: #{tpu_custom_call.1} parent=1 // pred_check_branch
      %71 = sbr.rel (0) target = $region17
    $region16: #{tpu_custom_call.1} parent=1 // pred_region
      %72 = dma.done [#allocation3], 16
    $region17: #{tpu_custom_call.1} parent=1 // pred_fallthru
      _
    %73 = vsyncpa [#allocation3], 1

</llo_original>
